<compile_context>
chip_gen: v7x
topology: tpu7x:2x2x1
jax: 0.10.0
libtpu: 0.0.40
codegen_flags: <defaults>
</compile_context>

<pallas_src>
import functools

import jax
import jax.numpy as jnp
from jax.experimental import pallas as pl
from jax.experimental.pallas import tpu as pltpu

INPUT_SIZE = 10
HIDDEN = 16
OUT = 1


def _round_up(n, m):
    return ((n + m - 1) // m) * m


def sensornet_kernel(x_ref, w1_ref, b1_ref, w2_ref, b2_ref, o_ref, *, hidden_dtype):
    # x_ref : (INPUT_SIZE, TILE_B)   batch on lanes (in_dtype, bf16 by default)
    # w1_ref: (HIDDEN, INPUT_SIZE)   (in_dtype)
    # b1_ref: (HIDDEN, 1)            (f32)
    # w2_ref: (HIDDEN, 1)            (f32)
    # b2_ref: (1, 1)                 (f32)
    # o_ref : (OUT, TILE_B)          (f32)
    # fc1 on the MXU, f32 accumulation.
    h = jnp.dot(w1_ref[...], x_ref[...], preferred_element_type=jnp.float32)
    # Bias + ReLU + fc2 multiply in hidden_dtype (bf16 on the bf16 path:
    # halves ld/st + VPU work on the (16, tile_b) intermediate).
    h = h.astype(hidden_dtype)
    b1 = b1_ref[...].astype(hidden_dtype)
    w2 = w2_ref[...].astype(hidden_dtype)
    h = jnp.maximum(h + b1, jnp.zeros((), hidden_dtype))
    # fc2 has output width 1 -> keep it off the MXU: VPU multiply + sublane
    # reduce over the 16 hidden units, accumulating in f32.
    out = (h * w2).astype(jnp.float32).sum(axis=0, keepdims=True) + b2_ref[...]
    o_ref[...] = out.astype(o_ref.dtype)


def sensornet_forward(x, w1, b1, w2, b2, *, tile_b=None, in_dtype=jnp.bfloat16,
                      hidden_dtype=None):
    """x: (B, 10); w1: (10, 16); b1: (16,)/(1,16); w2: (16, 1); b2: (1,)/(1,1).

    Computes relu(x @ w1 + b1) @ w2 + b2 (PyTorch Linear semantics with the
    weights already stored transposed).  Returns (B, 1) float32.

    in_dtype: dtype x and w1 are streamed in (default bf16 -- halves the
              dominant HBM term).  Pass jnp.float32 (or None) for exact f32.
    hidden_dtype: dtype of the post-MXU hidden intermediate; defaults to bf16
              when in_dtype is bf16, else f32.
    """
    B = x.shape[0]
    in_dtype = jnp.dtype(in_dtype) if in_dtype is not None else jnp.dtype(x.dtype)
    if hidden_dtype is None:
        hidden_dtype = jnp.bfloat16 if in_dtype == jnp.bfloat16 else jnp.float32
    hidden_dtype = jnp.dtype(hidden_dtype)

    # ---- Batch tiling: lane-dense blocks, multiple of 128. -------------------
    b128 = _round_up(max(B, 1), 128)
    # Generation-safe VMEM cap: x double-buffer + padded output buffers +
    # (16, tile_b) intermediates stay well under 16 MiB (v5e scoped default).
    cap = 32768 if in_dtype.itemsize >= 4 else 65536
    if tile_b is None:
        # At least 2 grid steps for non-tiny batches (v7x has 2 TensorCores).
        min_steps = 2 if b128 >= 1024 else 1
        n_steps = max(min_steps, pl.cdiv(b128, cap))
        tile_b = _round_up(pl.cdiv(b128, n_steps), 128)
    tile_b = _round_up(min(int(tile_b), b128), 128)
    b_padded = _round_up(b128, tile_b)
    grid = (b_padded // tile_b,)

    # ---- Layout plumbing: ONE fused HBM pass over x (pad + T + downcast). ----
    pad = b_padded - B
    if pad:
        x_t = jnp.pad(x, ((0, pad), (0, 0))).T.astype(in_dtype)   # (INPUT_SIZE, b_padded)
    else:
        x_t = x.T.astype(in_dtype)

    # Weights: tiny, prepared once.  Only x/w1 are narrowed; biases/w2 stay f32.
    w1_t = jnp.reshape(w1, (INPUT_SIZE, HIDDEN)).T.astype(in_dtype)   # (HIDDEN, INPUT_SIZE)
    b1_c = jnp.reshape(b1, (HIDDEN, 1)).astype(jnp.float32)
    w2_c = jnp.reshape(w2, (HIDDEN, 1)).astype(jnp.float32)
    b2_c = jnp.reshape(b2, (1, 1)).astype(jnp.float32)

    kernel = functools.partial(sensornet_kernel, hidden_dtype=hidden_dtype)

    out_t = pl.pallas_call(
        kernel,
        out_shape=jax.ShapeDtypeStruct((OUT, b_padded), jnp.float32),
        grid=grid,
        in_specs=[
            pl.BlockSpec((INPUT_SIZE, tile_b), lambda i: (0, i)),   # x: streamed per step
            pl.BlockSpec((HIDDEN, INPUT_SIZE), lambda i: (0, 0)),   # w1: resident
            pl.BlockSpec((HIDDEN, 1), lambda i: (0, 0)),            # b1: resident
            pl.BlockSpec((HIDDEN, 1), lambda i: (0, 0)),            # w2: resident
            pl.BlockSpec((1, 1), lambda i: (0, 0)),                 # b2: resident
        ],
        out_specs=pl.BlockSpec((OUT, tile_b), lambda i: (0, i)),    # lane-dense output
        compiler_params=pltpu.CompilerParams(
            dimension_semantics=("parallel",),
        ),
    )(x_t, w1_t, b1_c, w2_c, b2_c)

    # Padded columns hold relu(b1)@w2 + b2 garbage -- sliced off here (keep it!).
    return out_t[:, :B].T                       # back to (B, 1)


def init_params(key):
    # Deterministic synthetic init (uniform, akin to PyTorch's default Linear init scale).
    k1, k2, k3, k4 = jax.random.split(key, 4)
    bound1 = 1.0 / (INPUT_SIZE ** 0.5)
    bound2 = 1.0 / (HIDDEN ** 0.5)
    w1 = jax.random.uniform(k1, (INPUT_SIZE, HIDDEN), jnp.float32, -bound1, bound1)
    b1 = jax.random.uniform(k2, (1, HIDDEN), jnp.float32, -bound1, bound1)
    w2 = jax.random.uniform(k3, (HIDDEN, OUT), jnp.float32, -bound2, bound2)
    b2 = jax.random.uniform(k4, (1, OUT), jnp.float32, -bound2, bound2)
    return w1, b1, w2, b2


def _ref(x, w1, b1, w2, b2):
    return jnp.maximum(x @ w1 + jnp.reshape(b1, (1, HIDDEN)), 0.0) @ w2 + jnp.reshape(b2, (1, OUT))


if __name__ == "__main__":
    key = jax.random.PRNGKey(0)
    kx, kx2, kx3, kp = jax.random.split(key, 4)
    w1, b1, w2, b2 = init_params(kp)

    # 1) Small batch, explicit f32 path, single grid step -> tight tolerance.
    batch = 8
    x = jax.random.normal(kx, (batch, INPUT_SIZE), jnp.float32)
    y = sensornet_forward(x, w1, b1, w2, b2, in_dtype=jnp.float32)
    jax.block_until_ready(y)
    ref = _ref(x, w1, b1, w2, b2)
    assert y.shape == (batch, OUT)
    assert jnp.allclose(y, ref, atol=1e-5, rtol=1e-5), "f32 small-batch mismatch"

    # 2) Non-multiple batch with an explicit multi-step grid, f32 path.
    batch2 = 300
    x2 = jax.random.normal(kx2, (batch2, INPUT_SIZE), jnp.float32)
    y2 = sensornet_forward(x2, w1, b1, w2, b2, tile_b=128, in_dtype=jnp.float32)
    jax.block_until_ready(y2)
    ref2 = _ref(x2, w1, b1, w2, b2)
    assert y2.shape == (batch2, OUT)
    assert jnp.allclose(y2, ref2, atol=1e-5, rtol=1e-5), "f32 tiled-batch mismatch"

    # 3) Default path (bf16 x/w1 + bf16 hidden, f32 biases/w2 + f32 accumulate).
    y3 = sensornet_forward(x2, w1, b1, w2, b2)
    jax.block_until_ready(y3)
    ref3 = _ref(x2.astype(jnp.bfloat16).astype(jnp.float32),
                w1.astype(jnp.bfloat16).astype(jnp.float32),
                b1, w2, b2)
    assert y3.shape == (batch2, OUT)
    assert jnp.allclose(y3, ref3, atol=5e-2, rtol=5e-2), "bf16 default-path mismatch"

    # 4) Larger batch exercising the auto tile-size / >=2-step grid logic.
    batch3 = 2048
    x3 = jax.random.normal(kx3, (batch3, INPUT_SIZE), jnp.float32)
    y4 = sensornet_forward(x3, w1, b1, w2, b2)
    jax.block_until_ready(y4)
    ref4 = _ref(x3.astype(jnp.bfloat16).astype(jnp.float32),
                w1.astype(jnp.bfloat16).astype(jnp.float32),
                b1, w2, b2)
    assert y4.shape == (batch3, OUT)
    assert jnp.allclose(y4, ref4, atol=5e-2, rtol=5e-2), "bf16 auto-tile mismatch"

    print("KERNEL_OK")
</pallas_src>

<mosaic_0001>
module attributes {stable_mosaic.version = 11 : i64} {
  func.func @sensornet_kernel(%arg0: i32, %arg1: memref<10x128xf32, #tpu.memory_space<vmem>>, %arg2: memref<16x10xf32, #tpu.memory_space<vmem>>, %arg3: memref<16x1xf32, #tpu.memory_space<vmem>>, %arg4: memref<16x1xf32, #tpu.memory_space<vmem>>, %arg5: memref<1x1xf32, #tpu.memory_space<vmem>>, %arg6: memref<1x128xf32, #tpu.memory_space<vmem>>) attributes {dimension_semantics = [#tpu.dimension_semantics<parallel>], iteration_bounds = array<i64: 1>, scalar_prefetch = 0 : i64, scratch_operands = 0 : i64, tpu.core_type = #tpu.core_type<tc>, window_params = [{transform_indices = @transform_0, window_bounds = array<i64: 10, 128>}, {pipeline_mode = #tpu.pipeline_mode<synchronous>, transform_indices = @transform_1, window_bounds = array<i64: 16, 10>}, {pipeline_mode = #tpu.pipeline_mode<synchronous>, transform_indices = @transform_2, window_bounds = array<i64: 16, 1>}, {pipeline_mode = #tpu.pipeline_mode<synchronous>, transform_indices = @transform_3, window_bounds = array<i64: 16, 1>}, {pipeline_mode = #tpu.pipeline_mode<synchronous>, transform_indices = @transform_4, window_bounds = array<i64: 1, 1>}, {transform_indices = @transform_5, window_bounds = array<i64: 1, 128>}]} {
    %c0 = arith.constant 0 : index
    %c0_0 = arith.constant 0 : index
    %0 = vector.load %arg2[%c0, %c0_0] : memref<16x10xf32, #tpu.memory_space<vmem>>, vector<16x10xf32>
    %c0_1 = arith.constant 0 : index
    %c0_2 = arith.constant 0 : index
    %1 = vector.load %arg1[%c0_1, %c0_2] : memref<10x128xf32, #tpu.memory_space<vmem>>, vector<10x128xf32>
    %cst = arith.constant dense<0.000000e+00> : vector<16x128xf32>
    %2 = tpu.matmul %0, %1, %cst {dimension_numbers = #tpu.dot_dimension_numbers<[1], [0], [0], [1], [0, 0, 1, 1], [], []>} : vector<16x10xf32>, vector<10x128xf32>, vector<16x128xf32> -> vector<16x128xf32>
    %c0_3 = arith.constant 0 : index
    %c0_4 = arith.constant 0 : index
    %3 = vector.load %arg3[%c0_3, %c0_4] : memref<16x1xf32, #tpu.memory_space<vmem>>, vector<16x1xf32>
    %c0_5 = arith.constant 0 : index
    %c0_6 = arith.constant 0 : index
    %4 = vector.load %arg4[%c0_5, %c0_6] : memref<16x1xf32, #tpu.memory_space<vmem>>, vector<16x1xf32>
    %5 = vector.broadcast %3 : vector<16x1xf32> to vector<16x128xf32>
    %6 = arith.addf %2, %5 : vector<16x128xf32>
    %cst_7 = arith.constant 0.000000e+00 : f32
    %7 = vector.broadcast %cst_7 : f32 to vector<16x128xf32>
    %8 = arith.maximumf %6, %7 : vector<16x128xf32>
    %9 = vector.broadcast %4 : vector<16x1xf32> to vector<16x128xf32>
    %10 = arith.mulf %8, %9 : vector<16x128xf32>
    %cst_8 = arith.constant dense<0.000000e+00> : vector<128xf32>
    %11 = vector.multi_reduction <add>, %10, %cst_8 [0] : vector<16x128xf32> to vector<128xf32>
    %12 = vector.shape_cast %11 : vector<128xf32> to vector<1x128xf32>
    %c0_9 = arith.constant 0 : index
    %c0_10 = arith.constant 0 : index
    %13 = vector.load %arg5[%c0_9, %c0_10] : memref<1x1xf32, #tpu.memory_space<vmem>>, vector<1x1xf32>
    %14 = vector.broadcast %13 : vector<1x1xf32> to vector<1x128xf32>
    %15 = arith.addf %12, %14 : vector<1x128xf32>
    %c0_11 = arith.constant 0 : index
    %c0_12 = arith.constant 0 : index
    %16 = vector.load %arg6[%c0_11, %c0_12] : memref<1x128xf32, #tpu.memory_space<vmem>>, vector<1x128xf32>
    tpu.vector_store %arg6[%c0_11, %c0_12], %15 {strides = array<i32>} : memref<1x128xf32, #tpu.memory_space<vmem>>, vector<1x128xf32>,
    return
  }
  func.func @transform_0(%arg0: i32) -> (i32, i32) {
    %c0_i32 = arith.constant 0 : i32
    %c0_i32_0 = arith.constant 0 : i32
    return %c0_i32, %arg0 : i32, i32
  }
  func.func @transform_1(%arg0: i32) -> (i32, i32) {
    %c0_i32 = arith.constant 0 : i32
    %c0_i32_0 = arith.constant 0 : i32
    %c0_i32_1 = arith.constant 0 : i32
    return %c0_i32, %c0_i32_0 : i32, i32
  }
  func.func @transform_2(%arg0: i32) -> (i32, i32) {
    %c0_i32 = arith.constant 0 : i32
    %c0_i32_0 = arith.constant 0 : i32
    %c0_i32_1 = arith.constant 0 : i32
    return %c0_i32, %c0_i32_0 : i32, i32
  }
  func.func @transform_3(%arg0: i32) -> (i32, i32) {
    %c0_i32 = arith.constant 0 : i32
    %c0_i32_0 = arith.constant 0 : i32
    %c0_i32_1 = arith.constant 0 : i32
    return %c0_i32, %c0_i32_0 : i32, i32
  }
  func.func @transform_4(%arg0: i32) -> (i32, i32) {
    %c0_i32 = arith.constant 0 : i32
    %c0_i32_0 = arith.constant 0 : i32
    %c0_i32_1 = arith.constant 0 : i32
    return %c0_i32, %c0_i32_0 : i32, i32
  }
  func.func @transform_5(%arg0: i32) -> (i32, i32) {
    %c0_i32 = arith.constant 0 : i32
    %c0_i32_0 = arith.constant 0 : i32
    return %c0_i32, %arg0 : i32, i32
  }
}

</mosaic_0001>

<llo_original>
// kernel: tpu_custom_call.1
$region0: #{tpu_custom_call.1}
  #allocation0 [shape = 'u32[]', space=smem, size = 0x4, offset = 0x4, fixed_abs, tag = 'smem constant byte address 0x4 - core index']
  #allocation1 [shape = 'u32[144,128]{1,0:T(1,128)}', space=vmem, size = 0x12000, scoped, tag = 'internal scratch']
  #allocation2 [shape = 'f32[1,1]{1,0:T(1,128)S(1)}', space=vmem, size = 0x200, scoped, tag = 'scoped memory for tpu_custom_call.1']
  %s0 = inlined_call_operand.vmem [shape: f32[10,128], index: 0, kind: input, shape index: {}]
  %s1 = inlined_call_operand.vmem [shape: f32[16,10], index: 1, kind: input, shape index: {}]
  %s2 = inlined_call_operand.vmem [shape: f32[16,1], index: 2, kind: input, shape index: {}]
  %s3 = inlined_call_operand.vmem [shape: f32[16,1], index: 3, kind: input, shape index: {}]
  %s4 = inlined_call_operand.<no memory space> [shape: f32[1,1], index: 4, kind: input, shape index: {}]
  %s5 = inlined_call_operand.hbm [shape: f32[1,128], index: 5, kind: output, shape index: {}]
  %s6 = sld [smem:[#allocation0]]
  $region30: #{tpu_custom_call.1} parent=0
    _
  %s8 = ssub.s32 1, %s6
  %s9 = scalar_select 0, %s8, %s6
  %v10 = vstv %s4
  %11 = vst [vmem:[#allocation2] sm:$0x1] %v10
  $region1: #{tpu_custom_call.1} parent=0
    #allocation3 [shape = 'u8[512]{0}', space=vmem, size = 0x400, scoped, tag = 'output window, operand 0, single buffered']
    #allocation4 [shape = 's32[1]{0}', space=sflag, size = 0x4, scoped, tag = 'scoped memory for tpu_custom_call.1']
    %12 = vsyncpa [#allocation4], 0
    // Predicated region
    $region2: #{tpu_custom_call.1} parent=1 // pred_check
      _
    $region3: #{tpu_custom_call.1} parent=1 // pred_check_branch
      %14 = sbr.rel (0) target = $region5
    $region4: #{tpu_custom_call.1} parent=1 // pred_region
      _
    $region5: #{tpu_custom_call.1} parent=1 // pred_fallthru
      _
    // Predicated region
    $region6: #{tpu_custom_call.1} parent=1 // pred_check
      _
    $region7: #{tpu_custom_call.1} parent=1 // pred_check_branch
      %16 = sbr.rel (0) target = $region9
    $region8: #{tpu_custom_call.1} parent=1 // pred_region
      _
    $region9: #{tpu_custom_call.1} parent=1 // pred_fallthru
      _
    // Predicated region
    $region10: #{tpu_custom_call.1} parent=1 // pred_check
      _
    $region11: #{tpu_custom_call.1} parent=1 // pred_check_branch
      %18 = sbr.rel (0) target = $region13
    $region12: #{tpu_custom_call.1} parent=1 // pred_region
      _
    $region13: #{tpu_custom_call.1} parent=1 // pred_fallthru
      _
    // Predicated region
    $region14: #{tpu_custom_call.1} parent=1 // pred_check
      _
    $region15: #{tpu_custom_call.1} parent=1 // pred_check_branch
      %20 = sbr.rel (0) target = $region17
    $region16: #{tpu_custom_call.1} parent=1 // pred_region
      _
    $region17: #{tpu_custom_call.1} parent=1 // pred_fallthru
      _
    // Predicated region
    $region18: #{tpu_custom_call.1} parent=1 // pred_check
      _
    $region19: #{tpu_custom_call.1} parent=1 // pred_check_branch
      %22 = sbr.rel (0) target = $region21
    $region20: #{tpu_custom_call.1} parent=1 // pred_region
      _
    $region21: #{tpu_custom_call.1} parent=1 // pred_fallthru
      _
    %v23 = vld [vmem:[%s1] sm:$0xff]
    %v24 = vld [vmem:[%s1 + $0x8] sm:$0xff]
    %v25 = vld [vmem:[%s0] sm:$0xff]
    %v26 = vld [vmem:[%s0 + $0x8] sm:$0x3]
    %v27 = vld [vmem:[%s2] sm:$0xff]
    %v28 = vld [vmem:[%s2 + $0x8] sm:$0xff]
    %v29 = vld [vmem:[%s3] sm:$0xff]
    %v30 = vld [vmem:[%s3 + $0x8] sm:$0xff]
    %32 = vset.pattern.permute.xlu0 0
    %33 = vperm.xlu0 %32, %v27
    %v34 = vpop.permute.xlu0 %33
    %37 = vset.pattern.permute.xlu0 0
    %38 = vperm.xlu0 %37, %v28
    %v39 = vpop.permute.xlu0 %38
    %vm41 = vcmask 80896
    %v43 = vsel %vm41, %v23, 0
    %v46 = vsel %vm41, %v24, 0
    %vm48 = vcmask 1041408
    %v50 = vsel %vm48, %v26, 0
    %52 = vmatprep.subr.mxu0 0.0
    %53 = vmatpush1.msra.mxu0 %v25
    %54 = vmatprep.subr.mxu0 0.0
    %55 = vmatpush1.msra.mxu0 %v50
    %56 = vmatprep.subr.mxu0 0.0
    %57 = vmatpush1.msra.mxu0 0.0
    %58 = vmatprep.subr.mxu0 0.0
    %59 = vmatpush1.msra.mxu0 0.0
    %60 = vmatprep.subr.mxu0 0.0
    %61 = vmatpush1.msra.mxu0 0.0
    %62 = vmatprep.subr.mxu0 0.0
    %63 = vmatpush1.msra.mxu0 0.0
    %64 = vmatprep.subr.mxu0 0.0
    %65 = vmatpush1.msra.mxu0 0.0
    %66 = vmatprep.subr.mxu0 0.0
    %67 = vmatpush1.msra.mxu0 0.0
    %68 = vmatprep.subr.mxu0 0.0
    %69 = vmatpush1.msra.mxu0 0.0
    %70 = vmatprep.subr.mxu0 0.0
    %71 = vmatpush1.msra.mxu0 0.0
    %72 = vmatprep.subr.mxu0 0.0
    %73 = vmatpush1.msra.mxu0 0.0
    %74 = vmatprep.subr.mxu0 0.0
    %75 = vmatpush1.msra.mxu0 0.0
    %76 = vmatprep.subr.mxu0 0.0
    %77 = vmatpush1.msra.mxu0 0.0
    %78 = vmatprep.subr.mxu0 0.0
    %79 = vmatpush1.msra.mxu0 0.0
    %80 = vmatprep.subr.mxu0 0.0
    %81 = vmatpush1.msra.mxu0 0.0
    %82 = vmatprep.subr.mxu0 0.0
    %83 = vmatpush1.msra.mxu0 0.0
    %84 = vmatprep.subr.mxu0 0.0
    %85 = vmatpush1.msra.mxu0 0.0
    %86 = vmatprep.subr.mxu0 0.0
    %87 = vmatpush1.msra.mxu0 0.0
    %88 = vmatprep.subr.mxu0 0.0
    %89 = vmatpush1.msra.mxu0 0.0
    %90 = vmatprep.subr.mxu0 0.0
    %91 = vmatpush1.msra.mxu0 0.0
    %92 = vmatprep.subr.mxu0 0.0
    %93 = vmatpush1.msra.mxu0 0.0
    %94 = vmatprep.subr.mxu0 0.0
    %95 = vmatpush1.msra.mxu0 0.0
    %96 = vmatprep.subr.mxu0 0.0
    %97 = vmatpush1.msra.mxu0 0.0
    %98 = vmatprep.subr.mxu0 0.0
    %99 = vmatpush1.msra.mxu0 0.0
    %100 = vmatprep.subr.mxu0 0.0
    %101 = vmatpush1.msra.mxu0 0.0
    %102 = vmatprep.subr.mxu0 0.0
    %103 = vmatpush1.msra.mxu0 0.0
    %104 = vmatprep.subr.mxu0 0.0
    %105 = vmatpush1.msra.mxu0 0.0
    %106 = vmatprep.subr.mxu0 0.0
    %107 = vmatpush1.msra.mxu0 0.0
    %108 = vmatprep.subr.mxu0 0.0
    %109 = vmatpush1.msra.mxu0 0.0
    %110 = vmatprep.subr.mxu0 0.0
    %111 = vmatpush1.msra.mxu0 0.0
    %112 = vmatprep.subr.mxu0 0.0
    %113 = vmatpush1.msra.mxu0 0.0
    %114 = vmatprep.subr.mxu0 0.0
    %115 = vmatpush1.msra.mxu0 0.0
    %116 = vmatprep.mubr.f32.mxu0 0.0
    %117 = vmatmul.mubr.f32.gmra.mrb[0].mxu0 %v43
    %v118 = vpop.f32.mrb[0].mxu0
    %v119 = vadd.f32 %v34, %v118
    %v120 = vpop.f32.mrb[0].mxu0
    %121 = vmatprep.mubr.f32.mxu0 0.0
    %122 = vmatmul.mubr.f32.gmra.mrb[0].mxu0 %v46
    %v123 = vpop.f32.mrb[0].mxu0
    %v124 = vadd.f32 %v39, %v123
    %v125 = vpop.f32.mrb[0].mxu0
    %126 = vdwg.mxu0
    %v127 = vmax.f32 %v119, 0.0
    %v128 = vmax.f32 %v124, 0.0
    %130 = vset.pattern.permute.xlu0 0
    %131 = vperm.xlu0 %130, %v29
    %v132 = vpop.permute.xlu0 %131
    %135 = vset.pattern.permute.xlu0 0
    %136 = vperm.xlu0 %135, %v30
    %v137 = vpop.permute.xlu0 %136
    %v139 = vmul.f32 %v127, %v132
    %v140 = vmul.f32 %v128, %v137
    %v141 = vadd.f32 %v139, %v140
    %v142 = vrot.slane %v141, 4
    %v143 = vadd.f32 %v141, %v142
    %v144 = vrot.slane %v143, 2
    %v145 = vadd.f32 %v143, %v144
    %v146 = vrot.slane %v145, 1
    %v147 = vadd.f32 %v145, %v146
    %v148 = vld [vmem:[#allocation2] sm:$0x1]
    %150 = vset.pattern.permute.xlu0 0
    %151 = vperm.xlu0 %150, %v148
    %v152 = vpop.permute.xlu0 %151
    %v154 = vlaneseq
    %v155 = vshrl.u32 %v154, 7
    %v156 = vsub.s32 0, %v155
    %v157 = vrot.slane %v152, %v156
    %v158 = vadd.f32 %v147, %v157
    %159 = vst [vmem:[#allocation3] sm:$0x1] %v158
    // Predicated region
    $region22: #{tpu_custom_call.1} parent=1 // pred_check
      _
    $region23: #{tpu_custom_call.1} parent=1 // pred_check_branch
      %161 = sbr.rel (0) target = $region25
    $region24: #{tpu_custom_call.1} parent=1 // pred_region
      %s163 = ssub.s32 16, 16
      %164 = vsyncadd [#allocation4], %s163
      %s166 = sshll.u32 [#allocation3], 4
      %s167 = int_to_ptr.vmem [resolvable:$true] %s166
      %169 = dma.vmem_to_hbm [thread:$0]  %s167, 16, %s5, [#allocation4]
    $region25: #{tpu_custom_call.1} parent=1 // pred_fallthru
      _
    // Predicated region
    $region26: #{tpu_custom_call.1} parent=1 // pred_check
      _
    $region27: #{tpu_custom_call.1} parent=1 // pred_check_branch
      %171 = sbr.rel (0) target = $region29
    $region28: #{tpu_custom_call.1} parent=1 // pred_region
      %172 = dma.done [#allocation4], 16
    $region29: #{tpu_custom_call.1} parent=1 // pred_fallthru
      _
    %173 = vsyncpa [#allocation4], 1

</llo_original>
